<compile_context>
chip_gen: v5e
topology: v5e:2x2
jax: 0.10.0
libtpu: 0.0.40
codegen_flags: <defaults>
</compile_context>

<pallas_src>
import numpy as np
import jax
import jax.numpy as jnp
from jax.experimental import pallas as pl
from jax.experimental.pallas import tpu as pltpu

# --- "opt" hyper-parameters implied by the module ---
D_MODEL = 32
D_FF = 64
EPS = 1e-5  # nn.LayerNorm default


# ------------------------------ fused FFN kernel ------------------------------
def ffn_kernel(x_ref, w1_ref, w2_ref, p_ref, out_ref):
    x = x_ref[...]                                        # [d_model, TN] f32, lane-dense

    # Packed params: rows [0,64)=b1, [64,96)=b2, [96,128)=gamma, [128,160)=beta.
    b1 = p_ref[pl.ds(0, D_FF), :]                         # [d_ff, 1]
    b2 = p_ref[pl.ds(D_FF, D_MODEL), :]                   # [d_model, 1]
    gamma = p_ref[pl.ds(D_FF + D_MODEL, D_MODEL), :]      # [d_model, 1]
    beta = p_ref[pl.ds(D_FF + 2 * D_MODEL, D_MODEL), :]   # [d_model, 1]

    # conv1 (k=1) == per-position Linear: bf16 MXU operands, f32 accumulation.
    h = jnp.dot(w1_ref[...], x.astype(jnp.bfloat16),
                preferred_element_type=jnp.float32) + b1  # [d_ff, TN] f32
    h = jnp.maximum(h, 0.0)                               # ReLU in f32

    # conv2 (k=1)
    y = jnp.dot(w2_ref[...], h.astype(jnp.bfloat16),
                preferred_element_type=jnp.float32) + b2  # [d_model, TN] f32

    # Residual + LayerNorm over the feature (sublane) axis, all f32.
    z = y + x
    mean = jnp.mean(z, axis=0, keepdims=True)             # [1, TN]
    var = jnp.mean((z - mean) ** 2, axis=0, keepdims=True)
    out_ref[...] = (z - mean) * jax.lax.rsqrt(var + EPS) * gamma + beta


def pos_ffn(x, params, *, max_tile_tokens=1024):
    """x: [B, S, d_model] f32. params: (w1 bf16 [d_ff,d_model], w2 bf16 [d_model,d_ff],
    packed f32 [160,1])."""
    B, S, D = x.shape
    assert D == D_MODEL
    w1, w2, packed = params

    N = B * S
    n128 = 128 * pl.cdiv(N, 128)           # lane-dense token count
    tn = min(n128, max_tile_tokens)        # tokens per grid step (multiple of 128)
    n_pad = tn * pl.cdiv(n128, tn)
    grid = (n_pad // tn,)

    # Feature-major, lane-dense layout: [d_model, n_pad]; padded columns are
    # computed but discarded (LayerNorm is per-token, so padding can't leak).
    xt = x.reshape(N, D).T
    if n_pad != N:
        xt = jnp.pad(xt, ((0, 0), (0, n_pad - N)))

    # Grid-invariant params: full blocks with constant index_map -> one DMA,
    # resident in VMEM across all grid steps.
    full = lambda a: pl.BlockSpec(a.shape, lambda n: (0,) * a.ndim)

    out_t = pl.pallas_call(
        ffn_kernel,
        out_shape=jax.ShapeDtypeStruct((D, n_pad), jnp.float32),
        grid_spec=pltpu.PrefetchScalarGridSpec(
            num_scalar_prefetch=0,
            grid=grid,
            in_specs=[
                pl.BlockSpec((D, tn), lambda n: (0, n)),   # x tile (lane-dense)
                full(w1), full(w2), full(packed),
            ],
            out_specs=pl.BlockSpec((D, tn), lambda n: (0, n)),
        ),
        # Independent token tiles: "parallel" lets v7x shard multi-step grids
        # across its two TensorCores; single-step (toy size) it's a no-op.
        compiler_params=pltpu.CompilerParams(dimension_semantics=("parallel",)),
    )(xt, w1, w2, packed)

    return out_t[:, :N].T.reshape(B, S, D)


# ------------------------------ parameter init --------------------------------
def init_ffn_params(key):
    k1, k2, k3, k4, k5, k6 = jax.random.split(key, 6)
    # PyTorch Conv1d weights are [out, in, 1]; squeeze(-1) gives the
    # feature-major-friendly shapes directly:
    #   W1 = conv1.weight.squeeze(-1)  -> [d_ff, d_model]
    #   W2 = conv2.weight.squeeze(-1)  -> [d_model, d_ff]
    w1 = (jax.random.normal(k1, (D_FF, D_MODEL), jnp.float32) * 0.05).astype(jnp.bfloat16)
    w2 = (jax.random.normal(k2, (D_MODEL, D_FF), jnp.float32) * 0.05).astype(jnp.bfloat16)
    b1 = jax.random.normal(k3, (D_FF,), jnp.float32) * 0.1
    b2 = jax.random.normal(k4, (D_MODEL,), jnp.float32) * 0.1
    gamma = 1.0 + jax.random.normal(k5, (D_MODEL,), jnp.float32) * 0.1
    beta = jax.random.normal(k6, (D_MODEL,), jnp.float32) * 0.1
    # One packed parameter array -> one DMA descriptor instead of four.
    packed = jnp.concatenate([b1, b2, gamma, beta]).reshape(-1, 1)  # (160, 1) f32
    return (w1, w2, packed)


# ----------------------------- pure-JAX references -----------------------------
def _unpack(packed):
    b1 = packed[:D_FF, 0]
    b2 = packed[D_FF:D_FF + D_MODEL, 0]
    gamma = packed[D_FF + D_MODEL:D_FF + 2 * D_MODEL, 0]
    beta = packed[D_FF + 2 * D_MODEL:D_FF + 3 * D_MODEL, 0]
    return b1, b2, gamma, beta


def ref_pos_ffn(x, params, *, bf16_dots=True):
    w1, w2, packed = params
    b1, b2, gamma, beta = _unpack(packed)
    xr = x.reshape(-1, D_MODEL)
    if bf16_dots:
        h = jnp.dot(xr.astype(jnp.bfloat16), w1.T,
                    preferred_element_type=jnp.float32) + b1
    else:
        h = xr @ w1.astype(jnp.float32).T + b1
    h = jnp.maximum(h, 0.0)
    if bf16_dots:
        y = jnp.dot(h.astype(jnp.bfloat16), w2.T,
                    preferred_element_type=jnp.float32) + b2
    else:
        y = h @ w2.astype(jnp.float32).T + b2
    z = y + xr
    mean = jnp.mean(z, axis=-1, keepdims=True)
    var = jnp.mean((z - mean) ** 2, axis=-1, keepdims=True)
    out = (z - mean) * jax.lax.rsqrt(var + EPS) * gamma + beta
    return out.reshape(x.shape)


# ------------------------------------ main -------------------------------------
if __name__ == "__main__":
    B, S = 2, 8
    key = jax.random.PRNGKey(0)
    k_x, k_p = jax.random.split(key)

    inputs = jax.random.normal(k_x, (B, S, D_MODEL), jnp.float32)
    params = init_ffn_params(k_p)

    out = pos_ffn(inputs, params)
    jax.block_until_ready(out)

    # Tight check vs. a reference using the same bf16-operand / f32-accumulate dots.
    ref_bf16 = ref_pos_ffn(inputs, params, bf16_dots=True)
    np.testing.assert_allclose(np.asarray(out), np.asarray(ref_bf16), rtol=2e-3, atol=2e-3)

    # Loose check vs. the full-f32 module math (bf16 only perturbs the dots).
    ref_f32 = ref_pos_ffn(inputs, params, bf16_dots=False)
    np.testing.assert_allclose(np.asarray(out), np.asarray(ref_f32), rtol=2e-2, atol=2e-2)

    print("KERNEL_OK")
</pallas_src>

<mosaic_0001>
module attributes {stable_mosaic.version = 11 : i64} {
  func.func @ffn_kernel(%arg0: i32, %arg1: memref<32x128xf32, #tpu.memory_space<vmem>>, %arg2: memref<64x32xbf16, #tpu.memory_space<vmem>>, %arg3: memref<32x64xbf16, #tpu.memory_space<vmem>>, %arg4: memref<160x1xf32, #tpu.memory_space<vmem>>, %arg5: memref<32x128xf32, #tpu.memory_space<vmem>>) attributes {dimension_semantics = [#tpu.dimension_semantics<parallel>], iteration_bounds = array<i64: 1>, scalar_prefetch = 0 : i64, scratch_operands = 0 : i64, tpu.core_type = #tpu.core_type<tc>, window_params = [{transform_indices = @transform_0, window_bounds = array<i64: 32, 128>}, {pipeline_mode = #tpu.pipeline_mode<synchronous>, transform_indices = @transform_1, window_bounds = array<i64: 64, 32>}, {pipeline_mode = #tpu.pipeline_mode<synchronous>, transform_indices = @transform_2, window_bounds = array<i64: 32, 64>}, {pipeline_mode = #tpu.pipeline_mode<synchronous>, transform_indices = @transform_3, window_bounds = array<i64: 160, 1>}, {transform_indices = @transform_4, window_bounds = array<i64: 32, 128>}]} {
    %c0 = arith.constant 0 : index
    %c0_0 = arith.constant 0 : index
    %0 = vector.load %arg1[%c0, %c0_0] : memref<32x128xf32, #tpu.memory_space<vmem>>, vector<32x128xf32>
    %c0_1 = arith.constant 0 : index
    %c0_2 = arith.constant 0 : index
    %1 = vector.load %arg4[%c0_1, %c0_2] : memref<160x1xf32, #tpu.memory_space<vmem>>, vector<64x1xf32>
    %c64 = arith.constant 64 : index
    %c0_3 = arith.constant 0 : index
    %2 = vector.load %arg4[%c64, %c0_3] : memref<160x1xf32, #tpu.memory_space<vmem>>, vector<32x1xf32>
    %c96 = arith.constant 96 : index
    %c0_4 = arith.constant 0 : index
    %3 = vector.load %arg4[%c96, %c0_4] : memref<160x1xf32, #tpu.memory_space<vmem>>, vector<32x1xf32>
    %c128 = arith.constant 128 : index
    %c0_5 = arith.constant 0 : index
    %4 = vector.load %arg4[%c128, %c0_5] : memref<160x1xf32, #tpu.memory_space<vmem>>, vector<32x1xf32>
    %c0_6 = arith.constant 0 : index
    %c0_7 = arith.constant 0 : index
    %5 = vector.load %arg2[%c0_6, %c0_7] : memref<64x32xbf16, #tpu.memory_space<vmem>>, vector<64x32xbf16>
    %6 = arith.truncf %0 : vector<32x128xf32> to vector<32x128xbf16>
    %cst = arith.constant dense<0.000000e+00> : vector<64x128xf32>
    %7 = tpu.matmul %5, %6, %cst {dimension_numbers = #tpu.dot_dimension_numbers<[1], [0], [0], [1], [0, 0, 1, 1], [], []>} : vector<64x32xbf16>, vector<32x128xbf16>, vector<64x128xf32> -> vector<64x128xf32>
    %8 = vector.broadcast %1 : vector<64x1xf32> to vector<64x128xf32>
    %9 = arith.addf %7, %8 : vector<64x128xf32>
    %cst_8 = arith.constant 0.000000e+00 : f32
    %10 = vector.broadcast %cst_8 : f32 to vector<64x128xf32>
    %11 = arith.maximumf %9, %10 : vector<64x128xf32>
    %c0_9 = arith.constant 0 : index
    %c0_10 = arith.constant 0 : index
    %12 = vector.load %arg3[%c0_9, %c0_10] : memref<32x64xbf16, #tpu.memory_space<vmem>>, vector<32x64xbf16>
    %13 = arith.truncf %11 : vector<64x128xf32> to vector<64x128xbf16>
    %cst_11 = arith.constant dense<0.000000e+00> : vector<32x128xf32>
    %14 = tpu.matmul %12, %13, %cst_11 {dimension_numbers = #tpu.dot_dimension_numbers<[1], [0], [0], [1], [0, 0, 1, 1], [], []>} : vector<32x64xbf16>, vector<64x128xbf16>, vector<32x128xf32> -> vector<32x128xf32>
    %15 = vector.broadcast %2 : vector<32x1xf32> to vector<32x128xf32>
    %16 = arith.addf %14, %15 : vector<32x128xf32>
    %17 = arith.addf %16, %0 : vector<32x128xf32>
    %cst_12 = arith.constant dense<0.000000e+00> : vector<128xf32>
    %18 = vector.multi_reduction <add>, %17, %cst_12 [0] : vector<32x128xf32> to vector<128xf32>
    %19 = vector.shape_cast %18 : vector<128xf32> to vector<1x128xf32>
    %cst_13 = arith.constant 3.200000e+01 : f32
    %20 = vector.broadcast %cst_13 : f32 to vector<1x128xf32>
    %21 = arith.divf %19, %20 : vector<1x128xf32>
    %22 = vector.broadcast %21 : vector<1x128xf32> to vector<32x128xf32>
    %23 = arith.subf %17, %22 : vector<32x128xf32>
    %24 = arith.mulf %23, %23 : vector<32x128xf32>
    %cst_14 = arith.constant dense<0.000000e+00> : vector<128xf32>
    %25 = vector.multi_reduction <add>, %24, %cst_14 [0] : vector<32x128xf32> to vector<128xf32>
    %26 = vector.shape_cast %25 : vector<128xf32> to vector<1x128xf32>
    %cst_15 = arith.constant 3.200000e+01 : f32
    %27 = vector.broadcast %cst_15 : f32 to vector<1x128xf32>
    %28 = arith.divf %26, %27 : vector<1x128xf32>
    %29 = vector.broadcast %21 : vector<1x128xf32> to vector<32x128xf32>
    %30 = arith.subf %17, %29 : vector<32x128xf32>
    %cst_16 = arith.constant 9.99999974E-6 : f32
    %31 = vector.broadcast %cst_16 : f32 to vector<1x128xf32>
    %32 = arith.addf %28, %31 : vector<1x128xf32>
    %33 = math.rsqrt %32 : vector<1x128xf32>
    %34 = vector.broadcast %33 : vector<1x128xf32> to vector<32x128xf32>
    %35 = arith.mulf %30, %34 : vector<32x128xf32>
    %36 = vector.broadcast %3 : vector<32x1xf32> to vector<32x128xf32>
    %37 = arith.mulf %35, %36 : vector<32x128xf32>
    %38 = vector.broadcast %4 : vector<32x1xf32> to vector<32x128xf32>
    %39 = arith.addf %37, %38 : vector<32x128xf32>
    %c0_17 = arith.constant 0 : index
    %c0_18 = arith.constant 0 : index
    %40 = vector.load %arg5[%c0_17, %c0_18] : memref<32x128xf32, #tpu.memory_space<vmem>>, vector<32x128xf32>
    tpu.vector_store %arg5[%c0_17, %c0_18], %39 {strides = array<i32>} : memref<32x128xf32, #tpu.memory_space<vmem>>, vector<32x128xf32>,
    return
  }
  func.func @transform_0(%arg0: i32) -> (i32, i32) {
    %c0_i32 = arith.constant 0 : i32
    %c0_i32_0 = arith.constant 0 : i32
    return %c0_i32, %arg0 : i32, i32
  }
  func.func @transform_1(%arg0: i32) -> (i32, i32) {
    %c0_i32 = arith.constant 0 : i32
    %c0_i32_0 = arith.constant 0 : i32
    %c0_i32_1 = arith.constant 0 : i32
    return %c0_i32, %c0_i32_0 : i32, i32
  }
  func.func @transform_2(%arg0: i32) -> (i32, i32) {
    %c0_i32 = arith.constant 0 : i32
    %c0_i32_0 = arith.constant 0 : i32
    %c0_i32_1 = arith.constant 0 : i32
    return %c0_i32, %c0_i32_0 : i32, i32
  }
  func.func @transform_3(%arg0: i32) -> (i32, i32) {
    %c0_i32 = arith.constant 0 : i32
    %c0_i32_0 = arith.constant 0 : i32
    %c0_i32_1 = arith.constant 0 : i32
    return %c0_i32, %c0_i32_0 : i32, i32
  }
  func.func @transform_4(%arg0: i32) -> (i32, i32) {
    %c0_i32 = arith.constant 0 : i32
    %c0_i32_0 = arith.constant 0 : i32
    return %c0_i32, %arg0 : i32, i32
  }
}

</mosaic_0001>

<llo_original>
// kernel: tpu_custom_call.1
$region0: #{tpu_custom_call.1}
  #allocation0 [shape = 'u32[]', space=smem, size = 0x4, offset = 0x4, fixed_abs, tag = 'smem constant byte address 0x4 - core index']
  #allocation1 [shape = 'u32[72,128]{1,0:T(1,128)}', space=vmem, size = 0x9000, scoped, tag = 'internal scratch']
  %s0 = inlined_call_operand.vmem [shape: f32[32,128], index: 0, kind: input, shape index: {}]
  %s1 = inlined_call_operand.vmem [shape: bf16[64,32], index: 1, kind: input, shape index: {}]
  %s2 = inlined_call_operand.vmem [shape: bf16[32,64], index: 2, kind: input, shape index: {}]
  %s3 = inlined_call_operand.vmem [shape: f32[160,1], index: 3, kind: input, shape index: {}]
  %s4 = inlined_call_operand.hbm [shape: f32[32,128], index: 4, kind: output, shape index: {}]
  %s5 = sld [smem:[#allocation0]]
  $region26: #{tpu_custom_call.1} parent=0
    _
  %s7 = ssub.s32 1, %s5
  %s8 = scalar_select 0, %s7, %s5
  $region1: #{tpu_custom_call.1} parent=0
    #allocation2 [shape = 'u8[16384]{0}', space=vmem, size = 0x4000, scoped, tag = 'output window, operand 0, single buffered']
    #allocation3 [shape = 's32[1]{0}', space=sflag, size = 0x4, scoped, tag = 'scoped memory for tpu_custom_call.1']
    %9 = vsyncpa [#allocation3], 0
    // Predicated region
    $region2: #{tpu_custom_call.1} parent=1 // pred_check
      _
    $region3: #{tpu_custom_call.1} parent=1 // pred_check_branch
      %11 = sbr.rel (0) target = $region5
    $region4: #{tpu_custom_call.1} parent=1 // pred_region
      _
    $region5: #{tpu_custom_call.1} parent=1 // pred_fallthru
      _
    // Predicated region
    $region6: #{tpu_custom_call.1} parent=1 // pred_check
      _
    $region7: #{tpu_custom_call.1} parent=1 // pred_check_branch
      %13 = sbr.rel (0) target = $region9
    $region8: #{tpu_custom_call.1} parent=1 // pred_region
      _
    $region9: #{tpu_custom_call.1} parent=1 // pred_fallthru
      _
    // Predicated region
    $region10: #{tpu_custom_call.1} parent=1 // pred_check
      _
    $region11: #{tpu_custom_call.1} parent=1 // pred_check_branch
      %15 = sbr.rel (0) target = $region13
    $region12: #{tpu_custom_call.1} parent=1 // pred_region
      _
    $region13: #{tpu_custom_call.1} parent=1 // pred_fallthru
      _
    // Predicated region
    $region14: #{tpu_custom_call.1} parent=1 // pred_check
      _
    $region15: #{tpu_custom_call.1} parent=1 // pred_check_branch
      %17 = sbr.rel (0) target = $region17
    $region16: #{tpu_custom_call.1} parent=1 // pred_region
      _
    $region17: #{tpu_custom_call.1} parent=1 // pred_fallthru
      _
    %v19 = vld [vmem:[%s0] sm:$0xff]
    %v20 = vld [vmem:[%s0 + $0x8] sm:$0xff]
    %v21 = vld [vmem:[%s0 + $0x10] sm:$0xff]
    %v22 = vld [vmem:[%s0 + $0x18] sm:$0xff]
    %v23 = vld [vmem:[%s3] sm:$0xff]
    %v24 = vld [vmem:[%s3 + $0x8] sm:$0xff]
    %v25 = vld [vmem:[%s3 + $0x10] sm:$0xff]
    %v26 = vld [vmem:[%s3 + $0x18] sm:$0xff]
    %v27 = vld [vmem:[%s3 + $0x20] sm:$0xff]
    %v28 = vld [vmem:[%s3 + $0x28] sm:$0xff]
    %v29 = vld [vmem:[%s3 + $0x30] sm:$0xff]
    %v30 = vld [vmem:[%s3 + $0x38] sm:$0xff]
    %v31 = vld [vmem:[%s3 + $0x40] sm:$0xff]
    %v32 = vld [vmem:[%s3 + $0x48] sm:$0xff]
    %v33 = vld [vmem:[%s3 + $0x50] sm:$0xff]
    %v34 = vld [vmem:[%s3 + $0x58] sm:$0xff]
    %v35 = vld [vmem:[%s3 + $0x60] sm:$0xff]
    %v36 = vld [vmem:[%s3 + $0x68] sm:$0xff]
    %v37 = vld [vmem:[%s3 + $0x70] sm:$0xff]
    %v38 = vld [vmem:[%s3 + $0x78] sm:$0xff]
    %v39 = vld [vmem:[%s3 + $0x80] sm:$0xff]
    %v40 = vld [vmem:[%s3 + $0x88] sm:$0xff]
    %v41 = vld [vmem:[%s3 + $0x90] sm:$0xff]
    %v42 = vld [vmem:[%s3 + $0x98] sm:$0xff]
    %v43 = vld [vmem:[%s1] sm:$0xf]
    %v44 = vld [vmem:[%s1 + $0x4] sm:$0xf]
    %v45 = vld [vmem:[%s1 + $0x8] sm:$0xf]
    %v46 = vld [vmem:[%s1 + $0xc] sm:$0xf]
    %v47 = vld [vmem:[%s1 + $0x10] sm:$0xf]
    %v48 = vld [vmem:[%s1 + $0x14] sm:$0xf]
    %v49 = vld [vmem:[%s1 + $0x18] sm:$0xf]
    %v50 = vld [vmem:[%s1 + $0x1c] sm:$0xf]
    %v51 = vpack.c.bf16 %v20, %v19
    %v52 = vpack.c.bf16 %v22, %v21
    %54 = vset.pattern.permute.xlu0 0
    %55 = vperm.xlu0 %54, %v23
    %v56 = vpop.permute.xlu0 %55
    %59 = vset.pattern.permute.xlu0 0
    %60 = vperm.xlu0 %59, %v24
    %v61 = vpop.permute.xlu0 %60
    %64 = vset.pattern.permute.xlu0 0
    %65 = vperm.xlu0 %64, %v25
    %v66 = vpop.permute.xlu0 %65
    %69 = vset.pattern.permute.xlu0 0
    %70 = vperm.xlu0 %69, %v26
    %v71 = vpop.permute.xlu0 %70
    %74 = vset.pattern.permute.xlu0 0
    %75 = vperm.xlu0 %74, %v27
    %v76 = vpop.permute.xlu0 %75
    %79 = vset.pattern.permute.xlu0 0
    %80 = vperm.xlu0 %79, %v28
    %v81 = vpop.permute.xlu0 %80
    %84 = vset.pattern.permute.xlu0 0
    %85 = vperm.xlu0 %84, %v29
    %v86 = vpop.permute.xlu0 %85
    %89 = vset.pattern.permute.xlu0 0
    %90 = vperm.xlu0 %89, %v30
    %v91 = vpop.permute.xlu0 %90
    %v101 = vunpack.c.l.b16 %v43
    %v102 = vunpack.c.l.b16 %v44
    %v103 = vunpack.c.l.b16 %v45
    %v104 = vunpack.c.l.b16 %v46
    %v105 = vunpack.c.l.b16 %v47
    %v106 = vunpack.c.l.b16 %v48
    %v107 = vunpack.c.l.b16 %v49
    %v108 = vunpack.c.l.b16 %v50
    %v109 = vpack.c.b16 %v102, %v101
    %v110 = vpack.c.b16 %v104, %v103
    %v111 = vpack.c.b16 %v106, %v105
    %v112 = vpack.c.b16 %v108, %v107
    %vm113 = vcmask 261120
    %v115 = vsel %vm113, %v109, 0
    %v118 = vsel %vm113, %v110, 0
    %v121 = vsel %vm113, %v111, 0
    %v124 = vsel %vm113, %v112, 0
    %126 = vmatpush.bf16.msra.mxu0 0
    %127 = vmatpush.bf16.msra.mxu0 0
    %128 = vmatpush.bf16.msra.mxu0 0
    %129 = vmatpush.bf16.msra.mxu0 0
    %130 = vmatpush.bf16.msra.mxu0 0
    %131 = vmatpush.bf16.msra.mxu0 0
    %132 = vmatpush.bf16.msra.mxu0 %v52
    %133 = vmatpush.bf16.msra.mxu0 %v51
    %134 = vmatmul.bf16.gmra.mxu0 %v115
    %v135 = vpop.f32.mrf.mxu0
    %v136 = vadd.f32 %v56, %v135
    %v137 = vpop.f32.mrf.mxu0
    %v138 = vadd.f32 %v61, %v137
    %139 = vmatmul.bf16.gmra.mxu0 %v118
    %v140 = vpop.f32.mrf.mxu0
    %v141 = vadd.f32 %v66, %v140
    %v142 = vpop.f32.mrf.mxu0
    %v143 = vadd.f32 %v71, %v142
    %144 = vmatmul.bf16.gmra.mxu0 %v121
    %v145 = vpop.f32.mrf.mxu0
    %v146 = vadd.f32 %v76, %v145
    %v147 = vpop.f32.mrf.mxu0
    %v148 = vadd.f32 %v81, %v147
    %149 = vmatmul.bf16.gmra.mxu0 %v124
    %v150 = vpop.f32.mrf.mxu0
    %v151 = vadd.f32 %v86, %v150
    %v152 = vpop.f32.mrf.mxu0
    %v153 = vadd.f32 %v91, %v152
    %154 = vdwg.mxu0
    %v155 = vmax.f32 %v136, 0.0
    %v156 = vmax.f32 %v138, 0.0
    %v157 = vmax.f32 %v141, 0.0
    %v158 = vmax.f32 %v143, 0.0
    %v159 = vmax.f32 %v146, 0.0
    %v160 = vmax.f32 %v148, 0.0
    %v161 = vmax.f32 %v151, 0.0
    %v162 = vmax.f32 %v153, 0.0
    %v163 = vld [vmem:[%s2] sm:$0xf]
    %v164 = vld [vmem:[%s2 + $0x4] sm:$0xf]
    %v165 = vld [vmem:[%s2 + $0x8] sm:$0xf]
    %v166 = vld [vmem:[%s2 + $0xc] sm:$0xf]
    %v167 = vpack.c.bf16 %v156, %v155
    %v168 = vpack.c.bf16 %v158, %v157
    %v169 = vpack.c.bf16 %v160, %v159
    %v170 = vpack.c.bf16 %v162, %v161
    %172 = vset.pattern.permute.xlu0 0
    %173 = vperm.xlu0 %172, %v31
    %v174 = vpop.permute.xlu0 %173
    %177 = vset.pattern.permute.xlu0 0
    %178 = vperm.xlu0 %177, %v32
    %v179 = vpop.permute.xlu0 %178
    %182 = vset.pattern.permute.xlu0 0
    %183 = vperm.xlu0 %182, %v33
    %v184 = vpop.permute.xlu0 %183
    %187 = vset.pattern.permute.xlu0 0
    %188 = vperm.xlu0 %187, %v34
    %v189 = vpop.permute.xlu0 %188
    %v195 = vunpack.c.l.b16 %v163
    %v196 = vunpack.c.l.b16 %v164
    %v197 = vunpack.c.l.b16 %v165
    %v198 = vunpack.c.l.b16 %v166
    %v199 = vpack.c.b16 %v196, %v195
    %v200 = vpack.c.b16 %v198, %v197
    %vm201 = vcmask 523264
    %v203 = vsel %vm201, %v199, 0
    %v206 = vsel %vm201, %v200, 0
    %208 = vmatpush.bf16.msra.mxu0 0
    %209 = vmatpush.bf16.msra.mxu0 0
    %210 = vmatpush.bf16.msra.mxu0 0
    %211 = vmatpush.bf16.msra.mxu0 0
    %212 = vmatpush.bf16.msra.mxu0 %v170
    %213 = vmatpush.bf16.msra.mxu0 %v169
    %214 = vmatpush.bf16.msra.mxu0 %v168
    %215 = vmatpush.bf16.msra.mxu0 %v167
    %216 = vmatmul.bf16.gmra.mxu0 %v203
    %v217 = vpop.f32.mrf.mxu0
    %v218 = vadd.f32 %v174, %v217
    %v219 = vpop.f32.mrf.mxu0
    %v220 = vadd.f32 %v179, %v219
    %221 = vmatmul.bf16.gmra.mxu0 %v206
    %v222 = vpop.f32.mrf.mxu0
    %v223 = vadd.f32 %v184, %v222
    %v224 = vpop.f32.mrf.mxu0
    %v225 = vadd.f32 %v189, %v224
    %226 = vdwg.mxu0
    %v227 = vadd.f32 %v218, %v19
    %v228 = vadd.f32 %v220, %v20
    %v229 = vadd.f32 %v223, %v21
    %v230 = vadd.f32 %v225, %v22
    %v231 = vadd.f32 %v227, %v228
    %v232 = vadd.f32 %v231, %v229
    %v233 = vadd.f32 %v232, %v230
    %v234 = vrot.slane %v233, 4
    %v235 = vadd.f32 %v233, %v234
    %v236 = vrot.slane %v235, 2
    %v237 = vadd.f32 %v235, %v236
    %v238 = vrot.slane %v237, 1
    %v239 = vadd.f32 %v237, %v238
    %v240 = vrcp.pop 32.0
    %v241 = vmul.f32 32.0, %v240
    %v242 = vsub.f32 1.0, %v241
    %v243 = vmul.f32 %v240, %v242
    %v244 = vadd.f32 %v240, %v243
    %vm245 = vweird.f32 %v240
    %v246 = vsel %vm245, %v240, %v244
    %v247 = vmul.f32 %v239, %v246
    %v248 = vsub.f32 %v227, %v247
    %v249 = vsub.f32 %v228, %v247
    %v250 = vsub.f32 %v229, %v247
    %v251 = vsub.f32 %v230, %v247
    %v252 = vmul.f32 %v248, %v248
    %v253 = vmul.f32 %v249, %v249
    %v254 = vmul.f32 %v250, %v250
    %v255 = vmul.f32 %v251, %v251
    %v256 = vadd.f32 %v252, %v253
    %v257 = vadd.f32 %v256, %v254
    %v258 = vadd.f32 %v257, %v255
    %v259 = vrot.slane %v258, 4
    %v260 = vadd.f32 %v258, %v259
    %v261 = vrot.slane %v260, 2
    %v262 = vadd.f32 %v260, %v261
    %v263 = vrot.slane %v262, 1
    %v264 = vadd.f32 %v262, %v263
    %v265 = vmul.f32 %v264, %v246
    %v266 = vadd.f32 %v265, 1e-05
    %v267 = vrsqrt.pop %v266
    %v268 = vmul.f32 %v267, %v266
    %v269 = vmul.f32 %v268, %v267
    %v270 = vmul.f32 0.5, %v269
    %v271 = vsub.f32 1.5, %v270
    %v272 = vmul.f32 %v267, %v271
    %vm273 = vweird.f32 %v266
    %vm274 = vweird.f32 %v267
    %vm275 = vmor %vm273, %vm274
    %v276 = vsel %vm275, %v267, %v272
    %v277 = vmul.f32 %v248, %v276
    %v278 = vmul.f32 %v249, %v276
    %v279 = vmul.f32 %v250, %v276
    %v280 = vmul.f32 %v251, %v276
    %282 = vset.pattern.permute.xlu0 0
    %283 = vperm.xlu0 %282, %v35
    %v284 = vpop.permute.xlu0 %283
    %287 = vset.pattern.permute.xlu0 0
    %288 = vperm.xlu0 %287, %v36
    %v289 = vpop.permute.xlu0 %288
    %292 = vset.pattern.permute.xlu0 0
    %293 = vperm.xlu0 %292, %v37
    %v294 = vpop.permute.xlu0 %293
    %297 = vset.pattern.permute.xlu0 0
    %298 = vperm.xlu0 %297, %v38
    %v299 = vpop.permute.xlu0 %298
    %v301 = vmul.f32 %v277, %v284
    %v302 = vmul.f32 %v278, %v289
    %v303 = vmul.f32 %v279, %v294
    %v304 = vmul.f32 %v280, %v299
    %306 = vset.pattern.permute.xlu0 0
    %307 = vperm.xlu0 %306, %v39
    %v308 = vpop.permute.xlu0 %307
    %311 = vset.pattern.permute.xlu0 0
    %312 = vperm.xlu0 %311, %v40
    %v313 = vpop.permute.xlu0 %312
    %316 = vset.pattern.permute.xlu0 0
    %317 = vperm.xlu0 %316, %v41
    %v318 = vpop.permute.xlu0 %317
    %321 = vset.pattern.permute.xlu0 0
    %322 = vperm.xlu0 %321, %v42
    %v323 = vpop.permute.xlu0 %322
    %v325 = vadd.f32 %v301, %v308
    %v326 = vadd.f32 %v302, %v313
    %v327 = vadd.f32 %v303, %v318
    %v328 = vadd.f32 %v304, %v323
    %329 = vst [vmem:[#allocation2] sm:$0xff] %v325
    %330 = vst [vmem:[#allocation2 + $0x8] sm:$0xff] %v326
    %331 = vst [vmem:[#allocation2 + $0x10] sm:$0xff] %v327
    %332 = vst [vmem:[#allocation2 + $0x18] sm:$0xff] %v328
    // Predicated region
    $region18: #{tpu_custom_call.1} parent=1 // pred_check
      _
    $region19: #{tpu_custom_call.1} parent=1 // pred_check_branch
      %334 = sbr.rel (0) target = $region21
    $region20: #{tpu_custom_call.1} parent=1 // pred_region
      %336 = vsyncadd [#allocation3], 0
      %s337 = sshll.u32 [#allocation2], 4
      %s338 = int_to_ptr.vmem [resolvable:$true] %s337
      %s339 = sshll.u32 %s4, 4
      %s340 = int_to_ptr.hbm [resolvable:$true] %s339
      %345 = dma.vmem_to_hbm [thread:$0]  %s338, 512, %s340, [#allocation3], 128, 128, 8
    $region21: #{tpu_custom_call.1} parent=1 // pred_fallthru
      _
    // Predicated region
    $region22: #{tpu_custom_call.1} parent=1 // pred_check
      _
    $region23: #{tpu_custom_call.1} parent=1 // pred_check_branch
      %347 = sbr.rel (0) target = $region25
    $region24: #{tpu_custom_call.1} parent=1 // pred_region
      %349 = dma.done [#allocation3], 512
    $region25: #{tpu_custom_call.1} parent=1 // pred_fallthru
      _
    %350 = vsyncpa [#allocation3], 1

</llo_original>
